<compile_context>
chip_gen: v5e
topology: v5e:2x2
jax: 0.10.0
libtpu: 0.0.40
codegen_flags: <defaults>
</compile_context>

<pallas_src>
import jax
import jax.numpy as jnp
from jax.experimental import pallas as pl
from jax.experimental.pallas import tpu as pltpu


def cnn_lstm_kernel(x_ref, bigw_ref, smalls_ref, out_ref, xg_ref):
    B, O = out_ref.shape
    BT = x_ref.shape[0]
    T = BT // B
    T2 = T // 2
    H = bigw_ref.shape[0]
    f32 = jnp.float32

    # ---- Conv1d(F=1 -> H, k=3, pad=1) + ReLU: pure VPU (no K=1 MXU dot) -----
    xb = jnp.broadcast_to(x_ref[...], (BT, H))           # lane-broadcast of (BT,1)
    w0 = smalls_ref[0:1, 0:H]                            # applies to x[t-1]
    w1 = smalls_ref[1:2, 0:H]                            # applies to x[t]
    w2 = smalls_ref[2:3, 0:H]                            # applies to x[t+1]
    bconv = smalls_ref[3:4, 0:H]

    # Rows are batch-major flat: r = b*T + t.  "same" padding = zero rows at
    # t == 0 / t == T-1, handled by an iota mask after a one-row shift.
    tpos = jax.lax.broadcasted_iota(jnp.int32, (BT, H), 0) % T
    zrow = jnp.zeros((1, H), f32)
    x_prev = jnp.where(tpos > 0,
                       jnp.concatenate([zrow, xb[:-1, :]], axis=0), 0.0)
    x_next = jnp.where(tpos < T - 1,
                       jnp.concatenate([xb[1:, :], zrow], axis=0), 0.0)
    conv = jnp.maximum(x_prev * w0 + xb * w1 + x_next * w2 + bconv, 0.0)  # (BT,H)

    # ---- MaxPool1d(2,2): pair-max with the next row; even-t rows are valid ---
    conv_next = jnp.concatenate([conv[1:, :], zrow], axis=0)
    pooled_all = jnp.maximum(conv, conv_next)            # (BT, H)

    # ---- LSTM input projection hoisted out of the recurrence -----------------
    # Computed for all rows (2x a tiny MXU matmul); only even-t rows are read
    # by the loop.  wih/whh/blstm already carry the 0.5 sigmoid-via-tanh scale
    # on the i/f/o columns (folded in prepare_params).
    wih = bigw_ref[:, 0:4 * H]
    blstm = smalls_ref[4:5, 0:4 * H]
    xg_ref[...] = jnp.dot(pooled_all, wih, preferred_element_type=f32) + blstm

    # ---- Gate activation constants (hoisted): sigmoid(z)=0.5*tanh(z/2)+0.5 ---
    lane = jax.lax.broadcasted_iota(jnp.int32, (B, 4 * H), 1)
    is_g = (lane >= 2 * H) & (lane < 3 * H)              # gate order [i|f|g|o]
    post_mul = jnp.where(is_g, 1.0, 0.5).astype(f32)
    post_add = jnp.where(is_g, 0.0, 0.5).astype(f32)

    whh = bigw_ref[:, 4 * H:8 * H]                       # resident across the loop
    h = jnp.zeros((B, H), f32)
    c = jnp.zeros((B, H), f32)
    for t in range(T2):                                  # static unroll; T2 = 8
        # rows {b*T + 2t}: strided B-row load, off the serial h/c chain.
        xg_t = xg_ref[pl.ds(2 * t, B, stride=T), :]
        g_half = xg_t + jnp.dot(h, whh, preferred_element_type=f32)
        tg = jnp.tanh(g_half)                            # single EUP pass / step
        act = post_mul * tg + post_add                   # i,f,o = sigmoid; g = tanh
        i_g = act[:, 0 * H:1 * H]
        f_g = act[:, 1 * H:2 * H]
        g_g = act[:, 2 * H:3 * H]
        o_g = act[:, 3 * H:4 * H]
        c = f_g * c + i_g * g_g
        h = o_g * jnp.tanh(c)

    # ---- Final Linear on the last hidden state -------------------------------
    wfc = bigw_ref[:, 8 * H:8 * H + O]
    bfc = smalls_ref[5:6, 0:O]
    out_ref[...] = jnp.dot(h, wfc, preferred_element_type=f32) + bfc


def prepare_params(params):
    """One-time re-layout + packing of the PyTorch-style parameters."""
    w_conv, b_conv, w_ih, w_hh, b_ih, b_hh, w_fc, b_fc = params
    H, F, K = w_conv.shape
    assert F == 1 and K == 3
    O = w_fc.shape[0]

    # sigmoid-via-tanh: scale the i/f/o columns (and biases) by 0.5, g by 1.0.
    col_scale = jnp.concatenate([
        jnp.full((2 * H,), 0.5), jnp.ones((H,)), jnp.full((H,), 0.5)
    ]).astype(jnp.float32)
    wih_s = (w_ih.T * col_scale[None, :]).astype(jnp.float32)     # (H, 4H)
    whh_s = (w_hh.T * col_scale[None, :]).astype(jnp.float32)     # (H, 4H)
    blstm_s = ((b_ih + b_hh) * col_scale).astype(jnp.float32)     # (4H,)
    wfc = w_fc.T.astype(jnp.float32)                              # (H, O)

    # Pack the three matmul weights along lanes (128-aligned slices in-kernel).
    bigw = jnp.concatenate([wih_s, whh_s, wfc], axis=1)           # (H, 8H + O)

    # Pack all small row vectors into one (6, max(4H, O)) array.
    wmax = max(4 * H, O)

    def row(v):
        v = jnp.asarray(v, jnp.float32).reshape(1, -1)
        return jnp.pad(v, ((0, 0), (0, wmax - v.shape[1])))

    smalls = jnp.concatenate([
        row(w_conv[:, 0, 0]),       # w0 (x[t-1])
        row(w_conv[:, 0, 1]),       # w1 (x[t])
        row(w_conv[:, 0, 2]),       # w2 (x[t+1])
        row(b_conv),
        row(blstm_s),
        row(b_fc),
    ], axis=0)                       # (6, wmax)
    return (bigw, smalls)


@jax.jit
def cnn_lstm_forward(x, prepped):
    """x: (B, T, F=1) float32, prepped = prepare_params(params) -> (B, O)."""
    B, T, F = x.shape
    assert F == 1
    bigw, smalls = prepped
    H = bigw.shape[0]
    O = bigw.shape[1] - 8 * H

    x_flat = x.reshape(B * T, F)     # row-major bitcast; no transpose HLO op

    vmem = pl.BlockSpec(memory_space=pltpu.MemorySpace.VMEM)
    return pl.pallas_call(
        cnn_lstm_kernel,
        out_shape=jax.ShapeDtypeStruct((B, O), jnp.float32),
        in_specs=[vmem, vmem, vmem],
        out_specs=vmem,
        scratch_shapes=[pltpu.VMEM((B * T, 4 * H), jnp.float32)],
    )(x_flat, bigw, smalls)


def reference_forward(x, params):
    """Pure-JAX reference replicating PyTorch semantics."""
    B, T, F = x.shape
    w_conv, b_conv, w_ih, w_hh, b_ih, b_hh, w_fc, b_fc = params
    H = w_conv.shape[0]

    xpad = jnp.pad(x, ((0, 0), (1, 1), (0, 0)))
    conv = jnp.einsum('btkf,hfk->bth',
                      jnp.stack([xpad[:, k:k + T, :] for k in range(3)], axis=2),
                      w_conv) + b_conv
    conv = jnp.maximum(conv, 0.0)
    pooled = jnp.max(conv.reshape(B, T // 2, 2, H), axis=2)   # (B, T/2, H)

    h = jnp.zeros((B, H), jnp.float32)
    c = jnp.zeros((B, H), jnp.float32)
    for t in range(T // 2):
        xt = pooled[:, t, :]
        gates = xt @ w_ih.T + h @ w_hh.T + b_ih + b_hh
        i_g = jax.nn.sigmoid(gates[:, 0 * H:1 * H])
        f_g = jax.nn.sigmoid(gates[:, 1 * H:2 * H])
        g_g = jnp.tanh(gates[:, 2 * H:3 * H])
        o_g = jax.nn.sigmoid(gates[:, 3 * H:4 * H])
        c = f_g * c + i_g * g_g
        h = o_g * jnp.tanh(c)
    return h @ w_fc.T + b_fc


def init_params(key, F, H, O):
    """Deterministic PyTorch-style uniform init."""
    ks = jax.random.split(key, 8)
    u = lambda k, shape, bound: jax.random.uniform(
        k, shape, jnp.float32, -bound, bound)
    b_conv_bound = 1.0 / jnp.sqrt(F * 3.0)
    b_lstm_bound = 1.0 / jnp.sqrt(float(H))
    b_fc_bound = 1.0 / jnp.sqrt(float(H))
    w_conv = u(ks[0], (H, F, 3), b_conv_bound)      # Conv1d.weight
    b_conv = u(ks[1], (H,), b_conv_bound)           # Conv1d.bias
    w_ih = u(ks[2], (4 * H, H), b_lstm_bound)       # LSTM.weight_ih_l0
    w_hh = u(ks[3], (4 * H, H), b_lstm_bound)       # LSTM.weight_hh_l0
    b_ih = u(ks[4], (4 * H,), b_lstm_bound)         # LSTM.bias_ih_l0
    b_hh = u(ks[5], (4 * H,), b_lstm_bound)         # LSTM.bias_hh_l0
    w_fc = u(ks[6], (O, H), b_fc_bound)             # Linear.weight
    b_fc = u(ks[7], (O,), b_fc_bound)               # Linear.bias
    return (w_conv, b_conv, w_ih, w_hh, b_ih, b_hh, w_fc, b_fc)


if __name__ == "__main__":
    B, T, F = 2, 16, 1            # features=[0] -> F=1
    H, O = 32, 96                 # hidden_size=32, output_size=24*4

    key = jax.random.PRNGKey(0)
    kx, kp = jax.random.split(key)
    x = jax.random.normal(kx, (B, T, F), jnp.float32)
    params = init_params(kp, F, H, O)
    prepped = prepare_params(params)   # one-time parameter re-layout / packing

    out = jax.block_until_ready(cnn_lstm_forward(x, prepped))
    ref = jax.block_until_ready(reference_forward(x, params))

    assert out.shape == (B, O)
    assert jnp.allclose(out, ref, atol=1e-4, rtol=1e-4)
    print("KERNEL_OK")
</pallas_src>

<mosaic_0001>
module attributes {stable_mosaic.version = 11 : i64} {
  func.func @cnn_lstm_kernel(%arg0: memref<32x1xf32, #tpu.memory_space<vmem>>, %arg1: memref<32x352xf32, #tpu.memory_space<vmem>>, %arg2: memref<6x128xf32, #tpu.memory_space<vmem>>, %arg3: memref<2x96xf32, #tpu.memory_space<vmem>>, %arg4: memref<32x128xf32, #tpu.memory_space<vmem>>) attributes {dimension_semantics = [], scalar_prefetch = 0 : i64, scratch_operands = 1 : i64, tpu.core_type = #tpu.core_type<tc>} {
    %c0 = arith.constant 0 : index
    %c0_0 = arith.constant 0 : index
    %0 = vector.load %arg0[%c0, %c0_0] : memref<32x1xf32, #tpu.memory_space<vmem>>, vector<32x1xf32>
    %1 = vector.shape_cast %0 : vector<32x1xf32> to vector<32x1xf32>
    %2 = vector.broadcast %1 : vector<32x1xf32> to vector<32x32xf32>
    %c0_1 = arith.constant 0 : index
    %c0_2 = arith.constant 0 : index
    %3 = vector.load %arg2[%c0_1, %c0_2] : memref<6x128xf32, #tpu.memory_space<vmem>>, vector<1x32xf32>
    %c1 = arith.constant 1 : index
    %c0_3 = arith.constant 0 : index
    %4 = vector.load %arg2[%c1, %c0_3] : memref<6x128xf32, #tpu.memory_space<vmem>>, vector<1x32xf32>
    %c2 = arith.constant 2 : index
    %c0_4 = arith.constant 0 : index
    %5 = vector.load %arg2[%c2, %c0_4] : memref<6x128xf32, #tpu.memory_space<vmem>>, vector<1x32xf32>
    %c3 = arith.constant 3 : index
    %c0_5 = arith.constant 0 : index
    %6 = vector.load %arg2[%c3, %c0_5] : memref<6x128xf32, #tpu.memory_space<vmem>>, vector<1x32xf32>
    %7 = tpu.iota {dimensions = array<i32: 0>} : vector<32x32xi32>
    %c16_i32 = arith.constant 16 : i32
    %c0_i32 = arith.constant 0 : i32
    %8 = arith.cmpi eq, %c16_i32, %c0_i32 : i32
    %c1_i32 = arith.constant 1 : i32
    %9 = arith.select %8, %c1_i32, %c16_i32 : i32
    %10 = vector.broadcast %9 : i32 to vector<32x32xi32>
    %11 = arith.remsi %7, %10 : vector<32x32xi32>
    %c0_i32_6 = arith.constant 0 : i32
    %12 = vector.broadcast %c0_i32_6 : i32 to vector<32x32xi32>
    %13 = arith.cmpi ne, %11, %12 : vector<32x32xi32>
    %c0_i32_7 = arith.constant 0 : i32
    %14 = vector.broadcast %c0_i32_7 : i32 to vector<32x32xi32>
    %15 = arith.cmpi slt, %11, %14 : vector<32x32xi32>
    %c0_i32_8 = arith.constant 0 : i32
    %16 = arith.cmpi slt, %9, %c0_i32_8 : i32
    %17 = vector.broadcast %16 : i1 to vector<32x32xi1>
    %18 = vector.broadcast %17 : vector<32x32xi1> to vector<32x32xi1>
    %19 = arith.xori %15, %18 : vector<32x32xi1>
    %20 = arith.andi %19, %13 : vector<32x32xi1>
    %21 = vector.broadcast %9 : i32 to vector<32x32xi32>
    %22 = arith.addi %11, %21 : vector<32x32xi32>
    %23 = arith.select %20, %22, %11 : vector<32x32xi1>, vector<32x32xi32>
    %cst = arith.constant 0.000000e+00 : f32
    %24 = vector.broadcast %cst : f32 to vector<1x32xf32>
    %c0_i32_9 = arith.constant 0 : i32
    %25 = vector.broadcast %c0_i32_9 : i32 to vector<32x32xi32>
    %26 = arith.cmpi sgt, %23, %25 : vector<32x32xi32>
    %27 = vector.extract_strided_slice %2 {offsets = [0, 0], sizes = [31, 32], strides = [1, 1]} : vector<32x32xf32> to vector<31x32xf32>
    %28 = tpu.concatenate %24, %27 in 0 : vector<1x32xf32>, vector<31x32xf32> -> vector<32x32xf32>
    %cst_10 = arith.constant 0.000000e+00 : f32
    %29 = vector.broadcast %cst_10 : f32 to vector<32x32xf32>
    %30 = arith.select %26, %28, %29 : vector<32x32xi1>, vector<32x32xf32>
    %c15_i32 = arith.constant 15 : i32
    %31 = vector.broadcast %c15_i32 : i32 to vector<32x32xi32>
    %32 = arith.cmpi slt, %23, %31 : vector<32x32xi32>
    %33 = vector.extract_strided_slice %2 {offsets = [1, 0], sizes = [31, 32], strides = [1, 1]} : vector<32x32xf32> to vector<31x32xf32>
    %34 = tpu.concatenate %33, %24 in 0 : vector<31x32xf32>, vector<1x32xf32> -> vector<32x32xf32>
    %cst_11 = arith.constant 0.000000e+00 : f32
    %35 = vector.broadcast %cst_11 : f32 to vector<32x32xf32>
    %36 = arith.select %32, %34, %35 : vector<32x32xi1>, vector<32x32xf32>
    %37 = vector.broadcast %3 : vector<1x32xf32> to vector<32x32xf32>
    %38 = arith.mulf %30, %37 : vector<32x32xf32>
    %39 = vector.broadcast %4 : vector<1x32xf32> to vector<32x32xf32>
    %40 = arith.mulf %2, %39 : vector<32x32xf32>
    %41 = arith.addf %38, %40 : vector<32x32xf32>
    %42 = vector.broadcast %5 : vector<1x32xf32> to vector<32x32xf32>
    %43 = arith.mulf %36, %42 : vector<32x32xf32>
    %44 = arith.addf %41, %43 : vector<32x32xf32>
    %45 = vector.broadcast %6 : vector<1x32xf32> to vector<32x32xf32>
    %46 = arith.addf %44, %45 : vector<32x32xf32>
    %cst_12 = arith.constant 0.000000e+00 : f32
    %47 = vector.broadcast %cst_12 : f32 to vector<32x32xf32>
    %48 = arith.maximumf %46, %47 : vector<32x32xf32>
    %49 = vector.extract_strided_slice %48 {offsets = [1, 0], sizes = [31, 32], strides = [1, 1]} : vector<32x32xf32> to vector<31x32xf32>
    %50 = tpu.concatenate %49, %24 in 0 : vector<31x32xf32>, vector<1x32xf32> -> vector<32x32xf32>
    %51 = arith.maximumf %48, %50 : vector<32x32xf32>
    %c0_13 = arith.constant 0 : index
    %c0_14 = arith.constant 0 : index
    %52 = vector.load %arg1[%c0_13, %c0_14] : memref<32x352xf32, #tpu.memory_space<vmem>>, vector<32x128xf32>
    %c4 = arith.constant 4 : index
    %c0_15 = arith.constant 0 : index
    %53 = vector.load %arg2[%c4, %c0_15] : memref<6x128xf32, #tpu.memory_space<vmem>>, vector<1x128xf32>
    %cst_16 = arith.constant dense<0.000000e+00> : vector<32x128xf32>
    %54 = tpu.matmul %51, %52, %cst_16 {dimension_numbers = #tpu.dot_dimension_numbers<[1], [0], [0], [1], [0, 0, 1, 1], [], []>} : vector<32x32xf32>, vector<32x128xf32>, vector<32x128xf32> -> vector<32x128xf32>
    %55 = vector.broadcast %53 : vector<1x128xf32> to vector<32x128xf32>
    %56 = arith.addf %54, %55 : vector<32x128xf32>
    %c0_17 = arith.constant 0 : index
    %c0_18 = arith.constant 0 : index
    %57 = vector.load %arg4[%c0_17, %c0_18] : memref<32x128xf32, #tpu.memory_space<vmem>>, vector<32x128xf32>
    tpu.vector_store %arg4[%c0_17, %c0_18], %56 {strides = array<i32>} : memref<32x128xf32, #tpu.memory_space<vmem>>, vector<32x128xf32>,
    %58 = tpu.iota {dimensions = array<i32: 1>} : vector<2x128xi32>
    %c64_i32 = arith.constant 64 : i32
    %59 = vector.broadcast %c64_i32 : i32 to vector<2x128xi32>
    %60 = arith.cmpi sge, %58, %59 : vector<2x128xi32>
    %c96_i32 = arith.constant 96 : i32
    %61 = vector.broadcast %c96_i32 : i32 to vector<2x128xi32>
    %62 = arith.cmpi slt, %58, %61 : vector<2x128xi32>
    %63 = arith.andi %60, %62 : vector<2x128xi1>
    %cst_19 = arith.constant 1.000000e+00 : f32
    %cst_20 = arith.constant 5.000000e-01 : f32
    %64 = vector.broadcast %cst_19 : f32 to vector<2x128xf32>
    %65 = vector.broadcast %cst_20 : f32 to vector<2x128xf32>
    %66 = arith.select %63, %64, %65 : vector<2x128xi1>, vector<2x128xf32>
    %cst_21 = arith.constant 0.000000e+00 : f32
    %cst_22 = arith.constant 5.000000e-01 : f32
    %67 = vector.broadcast %cst_21 : f32 to vector<2x128xf32>
    %68 = vector.broadcast %cst_22 : f32 to vector<2x128xf32>
    %69 = arith.select %63, %67, %68 : vector<2x128xi1>, vector<2x128xf32>
    %c0_23 = arith.constant 0 : index
    %c128 = arith.constant 128 : index
    %70 = vector.load %arg1[%c0_23, %c128] : memref<32x352xf32, #tpu.memory_space<vmem>>, vector<32x128xf32>
    %cst_24 = arith.constant 0.000000e+00 : f32
    %71 = vector.broadcast %cst_24 : f32 to vector<2x32xf32>
    %cst_25 = arith.constant 0.000000e+00 : f32
    %72 = vector.broadcast %cst_25 : f32 to vector<2x32xf32>
    %c0_26 = arith.constant 0 : index
    %c0_27 = arith.constant 0 : index
    %73 = tpu.strided_load %arg4[%c0_26, %c0_27] {strides = array<i32: 16, 1>} : memref<32x128xf32, #tpu.memory_space<vmem>>, vector<2x128xf32>
    %cst_28 = arith.constant dense<0.000000e+00> : vector<2x128xf32>
    %74 = tpu.matmul %71, %70, %cst_28 {dimension_numbers = #tpu.dot_dimension_numbers<[1], [0], [0], [1], [0, 0, 1, 1], [], []>} : vector<2x32xf32>, vector<32x128xf32>, vector<2x128xf32> -> vector<2x128xf32>
    %75 = arith.addf %73, %74 : vector<2x128xf32>
    %76 = math.tanh %75 : vector<2x128xf32>
    %77 = arith.mulf %66, %76 : vector<2x128xf32>
    %78 = arith.addf %77, %69 : vector<2x128xf32>
    %79 = vector.extract_strided_slice %78 {offsets = [0, 0], sizes = [2, 32], strides = [1, 1]} : vector<2x128xf32> to vector<2x32xf32>
    %80 = vector.extract_strided_slice %78 {offsets = [0, 32], sizes = [2, 32], strides = [1, 1]} : vector<2x128xf32> to vector<2x32xf32>
    %81 = vector.extract_strided_slice %78 {offsets = [0, 64], sizes = [2, 32], strides = [1, 1]} : vector<2x128xf32> to vector<2x32xf32>
    %82 = vector.extract_strided_slice %78 {offsets = [0, 96], sizes = [2, 32], strides = [1, 1]} : vector<2x128xf32> to vector<2x32xf32>
    %83 = arith.mulf %80, %72 : vector<2x32xf32>
    %84 = arith.mulf %79, %81 : vector<2x32xf32>
    %85 = arith.addf %83, %84 : vector<2x32xf32>
    %86 = math.tanh %85 : vector<2x32xf32>
    %87 = arith.mulf %82, %86 : vector<2x32xf32>
    %c2_29 = arith.constant 2 : index
    %c0_30 = arith.constant 0 : index
    %88 = tpu.strided_load %arg4[%c2_29, %c0_30] {strides = array<i32: 16, 1>} : memref<32x128xf32, #tpu.memory_space<vmem>>, vector<2x128xf32>
    %cst_31 = arith.constant dense<0.000000e+00> : vector<2x128xf32>
    %89 = tpu.matmul %87, %70, %cst_31 {dimension_numbers = #tpu.dot_dimension_numbers<[1], [0], [0], [1], [0, 0, 1, 1], [], []>} : vector<2x32xf32>, vector<32x128xf32>, vector<2x128xf32> -> vector<2x128xf32>
    %90 = arith.addf %88, %89 : vector<2x128xf32>
    %91 = math.tanh %90 : vector<2x128xf32>
    %92 = arith.mulf %66, %91 : vector<2x128xf32>
    %93 = arith.addf %92, %69 : vector<2x128xf32>
    %94 = vector.extract_strided_slice %93 {offsets = [0, 0], sizes = [2, 32], strides = [1, 1]} : vector<2x128xf32> to vector<2x32xf32>
    %95 = vector.extract_strided_slice %93 {offsets = [0, 32], sizes = [2, 32], strides = [1, 1]} : vector<2x128xf32> to vector<2x32xf32>
    %96 = vector.extract_strided_slice %93 {offsets = [0, 64], sizes = [2, 32], strides = [1, 1]} : vector<2x128xf32> to vector<2x32xf32>
    %97 = vector.extract_strided_slice %93 {offsets = [0, 96], sizes = [2, 32], strides = [1, 1]} : vector<2x128xf32> to vector<2x32xf32>
    %98 = arith.mulf %95, %85 : vector<2x32xf32>
    %99 = arith.mulf %94, %96 : vector<2x32xf32>
    %100 = arith.addf %98, %99 : vector<2x32xf32>
    %101 = math.tanh %100 : vector<2x32xf32>
    %102 = arith.mulf %97, %101 : vector<2x32xf32>
    %c4_32 = arith.constant 4 : index
    %c0_33 = arith.constant 0 : index
    %103 = tpu.strided_load %arg4[%c4_32, %c0_33] {strides = array<i32: 16, 1>} : memref<32x128xf32, #tpu.memory_space<vmem>>, vector<2x128xf32>
    %cst_34 = arith.constant dense<0.000000e+00> : vector<2x128xf32>
    %104 = tpu.matmul %102, %70, %cst_34 {dimension_numbers = #tpu.dot_dimension_numbers<[1], [0], [0], [1], [0, 0, 1, 1], [], []>} : vector<2x32xf32>, vector<32x128xf32>, vector<2x128xf32> -> vector<2x128xf32>
    %105 = arith.addf %103, %104 : vector<2x128xf32>
    %106 = math.tanh %105 : vector<2x128xf32>
    %107 = arith.mulf %66, %106 : vector<2x128xf32>
    %108 = arith.addf %107, %69 : vector<2x128xf32>
    %109 = vector.extract_strided_slice %108 {offsets = [0, 0], sizes = [2, 32], strides = [1, 1]} : vector<2x128xf32> to vector<2x32xf32>
    %110 = vector.extract_strided_slice %108 {offsets = [0, 32], sizes = [2, 32], strides = [1, 1]} : vector<2x128xf32> to vector<2x32xf32>
    %111 = vector.extract_strided_slice %108 {offsets = [0, 64], sizes = [2, 32], strides = [1, 1]} : vector<2x128xf32> to vector<2x32xf32>
    %112 = vector.extract_strided_slice %108 {offsets = [0, 96], sizes = [2, 32], strides = [1, 1]} : vector<2x128xf32> to vector<2x32xf32>
    %113 = arith.mulf %110, %100 : vector<2x32xf32>
    %114 = arith.mulf %109, %111 : vector<2x32xf32>
    %115 = arith.addf %113, %114 : vector<2x32xf32>
    %116 = math.tanh %115 : vector<2x32xf32>
    %117 = arith.mulf %112, %116 : vector<2x32xf32>
    %c6 = arith.constant 6 : index
    %c0_35 = arith.constant 0 : index
    %118 = tpu.strided_load %arg4[%c6, %c0_35] {strides = array<i32: 16, 1>} : memref<32x128xf32, #tpu.memory_space<vmem>>, vector<2x128xf32>
    %cst_36 = arith.constant dense<0.000000e+00> : vector<2x128xf32>
    %119 = tpu.matmul %117, %70, %cst_36 {dimension_numbers = #tpu.dot_dimension_numbers<[1], [0], [0], [1], [0, 0, 1, 1], [], []>} : vector<2x32xf32>, vector<32x128xf32>, vector<2x128xf32> -> vector<2x128xf32>
    %120 = arith.addf %118, %119 : vector<2x128xf32>
    %121 = math.tanh %120 : vector<2x128xf32>
    %122 = arith.mulf %66, %121 : vector<2x128xf32>
    %123 = arith.addf %122, %69 : vector<2x128xf32>
    %124 = vector.extract_strided_slice %123 {offsets = [0, 0], sizes = [2, 32], strides = [1, 1]} : vector<2x128xf32> to vector<2x32xf32>
    %125 = vector.extract_strided_slice %123 {offsets = [0, 32], sizes = [2, 32], strides = [1, 1]} : vector<2x128xf32> to vector<2x32xf32>
    %126 = vector.extract_strided_slice %123 {offsets = [0, 64], sizes = [2, 32], strides = [1, 1]} : vector<2x128xf32> to vector<2x32xf32>
    %127 = vector.extract_strided_slice %123 {offsets = [0, 96], sizes = [2, 32], strides = [1, 1]} : vector<2x128xf32> to vector<2x32xf32>
    %128 = arith.mulf %125, %115 : vector<2x32xf32>
    %129 = arith.mulf %124, %126 : vector<2x32xf32>
    %130 = arith.addf %128, %129 : vector<2x32xf32>
    %131 = math.tanh %130 : vector<2x32xf32>
    %132 = arith.mulf %127, %131 : vector<2x32xf32>
    %c8 = arith.constant 8 : index
    %c0_37 = arith.constant 0 : index
    %133 = tpu.strided_load %arg4[%c8, %c0_37] {strides = array<i32: 16, 1>} : memref<32x128xf32, #tpu.memory_space<vmem>>, vector<2x128xf32>
    %cst_38 = arith.constant dense<0.000000e+00> : vector<2x128xf32>
    %134 = tpu.matmul %132, %70, %cst_38 {dimension_numbers = #tpu.dot_dimension_numbers<[1], [0], [0], [1], [0, 0, 1, 1], [], []>} : vector<2x32xf32>, vector<32x128xf32>, vector<2x128xf32> -> vector<2x128xf32>
    %135 = arith.addf %133, %134 : vector<2x128xf32>
    %136 = math.tanh %135 : vector<2x128xf32>
    %137 = arith.mulf %66, %136 : vector<2x128xf32>
    %138 = arith.addf %137, %69 : vector<2x128xf32>
    %139 = vector.extract_strided_slice %138 {offsets = [0, 0], sizes = [2, 32], strides = [1, 1]} : vector<2x128xf32> to vector<2x32xf32>
    %140 = vector.extract_strided_slice %138 {offsets = [0, 32], sizes = [2, 32], strides = [1, 1]} : vector<2x128xf32> to vector<2x32xf32>
    %141 = vector.extract_strided_slice %138 {offsets = [0, 64], sizes = [2, 32], strides = [1, 1]} : vector<2x128xf32> to vector<2x32xf32>
    %142 = vector.extract_strided_slice %138 {offsets = [0, 96], sizes = [2, 32], strides = [1, 1]} : vector<2x128xf32> to vector<2x32xf32>
    %143 = arith.mulf %140, %130 : vector<2x32xf32>
    %144 = arith.mulf %139, %141 : vector<2x32xf32>
    %145 = arith.addf %143, %144 : vector<2x32xf32>
    %146 = math.tanh %145 : vector<2x32xf32>
    %147 = arith.mulf %142, %146 : vector<2x32xf32>
    %c10 = arith.constant 10 : index
    %c0_39 = arith.constant 0 : index
    %148 = tpu.strided_load %arg4[%c10, %c0_39] {strides = array<i32: 16, 1>} : memref<32x128xf32, #tpu.memory_space<vmem>>, vector<2x128xf32>
    %cst_40 = arith.constant dense<0.000000e+00> : vector<2x128xf32>
    %149 = tpu.matmul %147, %70, %cst_40 {dimension_numbers = #tpu.dot_dimension_numbers<[1], [0], [0], [1], [0, 0, 1, 1], [], []>} : vector<2x32xf32>, vector<32x128xf32>, vector<2x128xf32> -> vector<2x128xf32>
    %150 = arith.addf %148, %149 : vector<2x128xf32>
    %151 = math.tanh %150 : vector<2x128xf32>
    %152 = arith.mulf %66, %151 : vector<2x128xf32>
    %153 = arith.addf %152, %69 : vector<2x128xf32>
    %154 = vector.extract_strided_slice %153 {offsets = [0, 0], sizes = [2, 32], strides = [1, 1]} : vector<2x128xf32> to vector<2x32xf32>
    %155 = vector.extract_strided_slice %153 {offsets = [0, 32], sizes = [2, 32], strides = [1, 1]} : vector<2x128xf32> to vector<2x32xf32>
    %156 = vector.extract_strided_slice %153 {offsets = [0, 64], sizes = [2, 32], strides = [1, 1]} : vector<2x128xf32> to vector<2x32xf32>
    %157 = vector.extract_strided_slice %153 {offsets = [0, 96], sizes = [2, 32], strides = [1, 1]} : vector<2x128xf32> to vector<2x32xf32>
    %158 = arith.mulf %155, %145 : vector<2x32xf32>
    %159 = arith.mulf %154, %156 : vector<2x32xf32>
    %160 = arith.addf %158, %159 : vector<2x32xf32>
    %161 = math.tanh %160 : vector<2x32xf32>
    %162 = arith.mulf %157, %161 : vector<2x32xf32>
    %c12 = arith.constant 12 : index
    %c0_41 = arith.constant 0 : index
    %163 = tpu.strided_load %arg4[%c12, %c0_41] {strides = array<i32: 16, 1>} : memref<32x128xf32, #tpu.memory_space<vmem>>, vector<2x128xf32>
    %cst_42 = arith.constant dense<0.000000e+00> : vector<2x128xf32>
    %164 = tpu.matmul %162, %70, %cst_42 {dimension_numbers = #tpu.dot_dimension_numbers<[1], [0], [0], [1], [0, 0, 1, 1], [], []>} : vector<2x32xf32>, vector<32x128xf32>, vector<2x128xf32> -> vector<2x128xf32>
    %165 = arith.addf %163, %164 : vector<2x128xf32>
    %166 = math.tanh %165 : vector<2x128xf32>
    %167 = arith.mulf %66, %166 : vector<2x128xf32>
    %168 = arith.addf %167, %69 : vector<2x128xf32>
    %169 = vector.extract_strided_slice %168 {offsets = [0, 0], sizes = [2, 32], strides = [1, 1]} : vector<2x128xf32> to vector<2x32xf32>
    %170 = vector.extract_strided_slice %168 {offsets = [0, 32], sizes = [2, 32], strides = [1, 1]} : vector<2x128xf32> to vector<2x32xf32>
    %171 = vector.extract_strided_slice %168 {offsets = [0, 64], sizes = [2, 32], strides = [1, 1]} : vector<2x128xf32> to vector<2x32xf32>
    %172 = vector.extract_strided_slice %168 {offsets = [0, 96], sizes = [2, 32], strides = [1, 1]} : vector<2x128xf32> to vector<2x32xf32>
    %173 = arith.mulf %170, %160 : vector<2x32xf32>
    %174 = arith.mulf %169, %171 : vector<2x32xf32>
    %175 = arith.addf %173, %174 : vector<2x32xf32>
    %176 = math.tanh %175 : vector<2x32xf32>
    %177 = arith.mulf %172, %176 : vector<2x32xf32>
    %c14 = arith.constant 14 : index
    %c0_43 = arith.constant 0 : index
    %178 = tpu.strided_load %arg4[%c14, %c0_43] {strides = array<i32: 16, 1>} : memref<32x128xf32, #tpu.memory_space<vmem>>, vector<2x128xf32>
    %cst_44 = arith.constant dense<0.000000e+00> : vector<2x128xf32>
    %179 = tpu.matmul %177, %70, %cst_44 {dimension_numbers = #tpu.dot_dimension_numbers<[1], [0], [0], [1], [0, 0, 1, 1], [], []>} : vector<2x32xf32>, vector<32x128xf32>, vector<2x128xf32> -> vector<2x128xf32>
    %180 = arith.addf %178, %179 : vector<2x128xf32>
    %181 = math.tanh %180 : vector<2x128xf32>
    %182 = arith.mulf %66, %181 : vector<2x128xf32>
    %183 = arith.addf %182, %69 : vector<2x128xf32>
    %184 = vector.extract_strided_slice %183 {offsets = [0, 0], sizes = [2, 32], strides = [1, 1]} : vector<2x128xf32> to vector<2x32xf32>
    %185 = vector.extract_strided_slice %183 {offsets = [0, 32], sizes = [2, 32], strides = [1, 1]} : vector<2x128xf32> to vector<2x32xf32>
    %186 = vector.extract_strided_slice %183 {offsets = [0, 64], sizes = [2, 32], strides = [1, 1]} : vector<2x128xf32> to vector<2x32xf32>
    %187 = vector.extract_strided_slice %183 {offsets = [0, 96], sizes = [2, 32], strides = [1, 1]} : vector<2x128xf32> to vector<2x32xf32>
    %188 = arith.mulf %185, %175 : vector<2x32xf32>
    %189 = arith.mulf %184, %186 : vector<2x32xf32>
    %190 = arith.addf %188, %189 : vector<2x32xf32>
    %191 = math.tanh %190 : vector<2x32xf32>
    %192 = arith.mulf %187, %191 : vector<2x32xf32>
    %c0_45 = arith.constant 0 : index
    %c256 = arith.constant 256 : index
    %193 = vector.load %arg1[%c0_45, %c256] : memref<32x352xf32, #tpu.memory_space<vmem>>, vector<32x96xf32>
    %c5 = arith.constant 5 : index
    %c0_46 = arith.constant 0 : index
    %194 = vector.load %arg2[%c5, %c0_46] : memref<6x128xf32, #tpu.memory_space<vmem>>, vector<1x96xf32>
    %cst_47 = arith.constant dense<0.000000e+00> : vector<2x96xf32>
    %195 = tpu.matmul %192, %193, %cst_47 {dimension_numbers = #tpu.dot_dimension_numbers<[1], [0], [0], [1], [0, 0, 1, 1], [], []>} : vector<2x32xf32>, vector<32x96xf32>, vector<2x96xf32> -> vector<2x96xf32>
    %196 = vector.broadcast %194 : vector<1x96xf32> to vector<2x96xf32>
    %197 = arith.addf %195, %196 : vector<2x96xf32>
    %c0_48 = arith.constant 0 : index
    %c0_49 = arith.constant 0 : index
    %198 = vector.load %arg3[%c0_48, %c0_49] : memref<2x96xf32, #tpu.memory_space<vmem>>, vector<2x96xf32>
    tpu.vector_store %arg3[%c0_48, %c0_49], %197 {strides = array<i32>} : memref<2x96xf32, #tpu.memory_space<vmem>>, vector<2x96xf32>,
    return
  }
}

</mosaic_0001>

<llo_original>
// kernel: cnn_lstm_forward.1
$region0: #{cnn_lstm_forward.1}
  #allocation0 [shape = 'u32[]', space=smem, size = 0x4, offset = 0x4, fixed_abs, tag = 'smem constant byte address 0x4 - core index']
  #allocation1 [shape = 'u32[72,128]{1,0:T(1,128)}', space=vmem, size = 0x9000, scoped, tag = 'internal scratch']
  #allocation2 [shape = 'f32[32,128]{1,0:T(8,128)}', space=vmem, size = 0x4000, scoped, tag = 'scratch operand']
  %s0 = inlined_call_operand.vmem [shape: f32[32,1], index: 0, kind: input, shape index: {}]
  %s1 = inlined_call_operand.hbm [shape: f32[32,352], index: 1, kind: input, shape index: {}]
  %s2 = inlined_call_operand.vmem [shape: f32[6,128], index: 2, kind: input, shape index: {}]
  %s3 = inlined_call_operand.hbm [shape: f32[2,96], index: 3, kind: output, shape index: {}]
  %s4 = sld [smem:[#allocation0]]
  $region26: #{cnn_lstm_forward.1} parent=0
    _
  %s6 = ssub.s32 1, %s4
  %s7 = scalar_select 0, %s6, %s4
  $region1: #{cnn_lstm_forward.1} parent=0
    #allocation3 [shape = 'u8[49152]{0}', space=vmem, size = 0xc000, scoped, tag = 'input window, operand 1, single buffered']
    #allocation4 [shape = 's32[1]{0}', space=sflag, size = 0x4, scoped, tag = 'scoped memory for cnn_lstm_forward.1']
    #allocation5 [shape = 's32[1]{0}', space=sflag, size = 0x4, scoped, tag = 'scoped memory for cnn_lstm_forward.1']
    #allocation6 [shape = 'u8[1024]{0}', space=vmem, size = 0x400, scoped, tag = 'output window, operand 0, single buffered']
    %8 = vsyncpa [#allocation4], 0
    %9 = vsyncpa [#allocation5], 0
    // Predicated region
    $region2: #{cnn_lstm_forward.1} parent=1 // pred_check
      _
    $region3: #{cnn_lstm_forward.1} parent=1 // pred_check_branch
      %11 = sbr.rel (0) target = $region5
    $region4: #{cnn_lstm_forward.1} parent=1 // pred_region
      _
    $region5: #{cnn_lstm_forward.1} parent=1 // pred_fallthru
      _
    // Predicated region
    $region6: #{cnn_lstm_forward.1} parent=1 // pred_check
      _
    $region7: #{cnn_lstm_forward.1} parent=1 // pred_check_branch
      %13 = sbr.rel (0) target = $region9
    $region8: #{cnn_lstm_forward.1} parent=1 // pred_region
      %15 = vsyncadd [#allocation4], 0
      %s16 = sshll.u32 %s1, 4
      %s17 = int_to_ptr.hbm [resolvable:$true] %s16
      %s18 = sshll.u32 [#allocation3], 4
      %s19 = int_to_ptr.vmem [resolvable:$true] %s18
      %24 = dma.hbm_to_vmem [thread:$0]  %s17, 1536, %s19, [#allocation4], 384, 384, 24
    $region9: #{cnn_lstm_forward.1} parent=1 // pred_fallthru
      _
    // Predicated region
    $region10: #{cnn_lstm_forward.1} parent=1 // pred_check
      _
    $region11: #{cnn_lstm_forward.1} parent=1 // pred_check_branch
      %26 = sbr.rel (0) target = $region13
    $region12: #{cnn_lstm_forward.1} parent=1 // pred_region
      _
    $region13: #{cnn_lstm_forward.1} parent=1 // pred_fallthru
      _
    // Predicated region
    $region14: #{cnn_lstm_forward.1} parent=1 // pred_check
      _
    $region15: #{cnn_lstm_forward.1} parent=1 // pred_check_branch
      %28 = sbr.rel (0) target = $region17
    $region16: #{cnn_lstm_forward.1} parent=1 // pred_region
      %30 = dma.done [#allocation4], 1536
    $region17: #{cnn_lstm_forward.1} parent=1 // pred_fallthru
      _
    %v31 = vld [vmem:[%s0] sm:$0xff]
    %v32 = vld [vmem:[%s0 + $0x8] sm:$0xff]
    %v33 = vld [vmem:[%s0 + $0x10] sm:$0xff]
    %v34 = vld [vmem:[%s0 + $0x18] sm:$0xff]
    %36 = vset.pattern.permute.xlu0 0
    %37 = vperm.xlu0 %36, %v31
    %v38 = vpop.permute.xlu0 %37
    %41 = vset.pattern.permute.xlu0 0
    %42 = vperm.xlu0 %41, %v32
    %v43 = vpop.permute.xlu0 %42
    %46 = vset.pattern.permute.xlu0 0
    %47 = vperm.xlu0 %46, %v33
    %v48 = vpop.permute.xlu0 %47
    %51 = vset.pattern.permute.xlu0 0
    %52 = vperm.xlu0 %51, %v34
    %v53 = vpop.permute.xlu0 %52
    %v55 = vld [vmem:[%s2] sm:$0x1]
    %v56 = vld [vmem:[%s2 + $0x1] sm:$0x1]
    %v57 = vld [vmem:[%s2 + $0x2] sm:$0x1]
    %v58 = vld [vmem:[%s2 + $0x3] sm:$0x1]
    %v59 = vlaneseq
    %v60 = vshrl.u32 %v59, 7
    %v61 = vadd.s32 %v60, 8
    %v62 = vadd.s32 %v60, 16
    %v63 = vadd.s32 %v60, 24
    %vm64 = vcmp.lt.s32.totalorder %v60, 0
    %v65 = vsub.s32 0, %v60
    %v66 = vsel %vm64, %v65, %v60
    %v67 = vshrl.u32 %v66, 4
    %v68 = vand.u32 %v66, 15
    %v69 = vsub.s32 0, %v68
    %v70 = vsel %vm64, %v69, %v68
    %vm71 = vcmp.lt.s32.totalorder %v61, 0
    %v72 = vsub.s32 0, %v61
    %v73 = vsel %vm71, %v72, %v61
    %v74 = vshrl.u32 %v73, 4
    %v75 = vand.u32 %v73, 15
    %v76 = vsub.s32 0, %v75
    %v77 = vsel %vm71, %v76, %v75
    %vm78 = vcmp.lt.s32.totalorder %v62, 0
    %v79 = vsub.s32 0, %v62
    %v80 = vsel %vm78, %v79, %v62
    %v81 = vshrl.u32 %v80, 4
    %v82 = vand.u32 %v80, 15
    %v83 = vsub.s32 0, %v82
    %v84 = vsel %vm78, %v83, %v82
    %vm85 = vcmp.lt.s32.totalorder %v63, 0
    %v86 = vsub.s32 0, %v63
    %v87 = vsel %vm85, %v86, %v63
    %v88 = vshrl.u32 %v87, 4
    %v89 = vand.u32 %v87, 15
    %v90 = vsub.s32 0, %v89
    %v91 = vsel %vm85, %v90, %v89
    %vm92 = vcmp.ne.s32.totalorder %v70, 0
    %vm93 = vcmp.ne.s32.totalorder %v77, 0
    %vm94 = vcmp.ne.s32.totalorder %v84, 0
    %vm95 = vcmp.ne.s32.totalorder %v91, 0
    %vm96 = vcmp.lt.s32.totalorder %v70, 0
    %vm97 = vcmp.lt.s32.totalorder %v77, 0
    %vm98 = vcmp.lt.s32.totalorder %v84, 0
    %vm99 = vcmp.lt.s32.totalorder %v91, 0
    %vm100 = vmand %vm96, %vm92
    %vm101 = vmand %vm97, %vm93
    %vm102 = vmand %vm98, %vm94
    %vm103 = vmand %vm99, %vm95
    %v104 = vadd.s32 %v70, 16
    %v105 = vadd.s32 %v77, 16
    %v106 = vadd.s32 %v84, 16
    %v107 = vadd.s32 %v91, 16
    %v108 = vsel %vm100, %v104, %v70
    %v109 = vsel %vm101, %v105, %v77
    %v110 = vsel %vm102, %v106, %v84
    %v111 = vsel %vm103, %v107, %v91
    %vm112 = vcmp.gt.s32.totalorder %v108, 0
    %vm113 = vcmp.gt.s32.totalorder %v109, 0
    %vm114 = vcmp.gt.s32.totalorder %v110, 0
    %vm115 = vcmp.gt.s32.totalorder %v111, 0
    %vm116 = vcmask 1040384
    %v117 = vrot.slane %v38, 7
    %v118 = vrot.slane %v43, 7
    %v119 = vsel %vm116, %v117, %v118
    %v120 = vrot.slane %v48, 7
    %v121 = vsel %vm116, %v118, %v120
    %v122 = vrot.slane %v53, 7
    %v123 = vsel %vm116, %v120, %v122
    %v128 = vsel %vm116, 0.0, %v117
    %v129 = vsel %vm112, %v128, 0.0
    %v130 = vsel %vm113, %v119, 0.0
    %v131 = vsel %vm114, %v121, 0.0
    %v132 = vsel %vm115, %v123, 0.0
    %vm133 = vcmp.lt.s32.totalorder %v108, 15
    %vm134 = vcmp.lt.s32.totalorder %v109, 15
    %vm135 = vcmp.lt.s32.totalorder %v110, 15
    %vm136 = vcmp.lt.s32.totalorder %v111, 15
    %vm137 = vcmask 1046528
    %v138 = vrot.slane %v38, 1
    %v139 = vrot.slane %v43, 1
    %v140 = vsel %vm137, %v138, %v139
    %v141 = vrot.slane %v48, 1
    %v142 = vsel %vm137, %v139, %v141
    %v143 = vrot.slane %v53, 1
    %v144 = vsel %vm137, %v141, %v143
    %v149 = vsel %vm137, %v143, 0.0
    %v150 = vsel %vm133, %v140, 0.0
    %v151 = vsel %vm134, %v142, 0.0
    %v152 = vsel %vm135, %v144, 0.0
    %v153 = vsel %vm136, %v149, 0.0
    %v154 = vperm.slane %v55, 0
    %v155 = vmul.f32 %v129, %v154
    %v156 = vmul.f32 %v130, %v154
    %v157 = vmul.f32 %v131, %v154
    %v158 = vmul.f32 %v132, %v154
    %v159 = vperm.slane %v56, 0
    %v160 = vmul.f32 %v38, %v159
    %v161 = vmul.f32 %v43, %v159
    %v162 = vmul.f32 %v48, %v159
    %v163 = vmul.f32 %v53, %v159
    %v164 = vadd.f32 %v155, %v160
    %v165 = vadd.f32 %v156, %v161
    %v166 = vadd.f32 %v157, %v162
    %v167 = vadd.f32 %v158, %v163
    %v168 = vperm.slane %v57, 0
    %v169 = vmul.f32 %v150, %v168
    %v170 = vmul.f32 %v151, %v168
    %v171 = vmul.f32 %v152, %v168
    %v172 = vmul.f32 %v153, %v168
    %v173 = vadd.f32 %v164, %v169
    %v174 = vadd.f32 %v165, %v170
    %v175 = vadd.f32 %v166, %v171
    %v176 = vadd.f32 %v167, %v172
    %v177 = vperm.slane %v58, 0
    %v178 = vadd.f32 %v173, %v177
    %v179 = vadd.f32 %v174, %v177
    %v180 = vadd.f32 %v175, %v177
    %v181 = vadd.f32 %v176, %v177
    %v182 = vmax.f32 %v178, 0.0
    %v183 = vmax.f32 %v179, 0.0
    %v184 = vmax.f32 %v180, 0.0
    %v185 = vmax.f32 %v181, 0.0
    %v190 = vrot.slane %v182, 1
    %v191 = vrot.slane %v183, 1
    %v192 = vsel %vm137, %v190, %v191
    %v193 = vrot.slane %v184, 1
    %v194 = vsel %vm137, %v191, %v193
    %v195 = vrot.slane %v185, 1
    %v196 = vsel %vm137, %v193, %v195
    %v201 = vsel %vm137, %v195, 0.0
    %v202 = vmax.f32 %v182, %v192
    %v203 = vmax.f32 %v183, %v194
    %v204 = vmax.f32 %v184, %v196
    %v205 = vmax.f32 %v185, %v201
    %v206 = vld [vmem:[#allocation3] sm:$0xff]
    %v207 = vld [vmem:[#allocation3 + $0x18] sm:$0xff]
    %v208 = vld [vmem:[#allocation3 + $0x30] sm:$0xff]
    %v209 = vld [vmem:[#allocation3 + $0x48] sm:$0xff]
    %v210 = vld [vmem:[%s2 + $0x4] sm:$0x1]
    %v211 = vperm.slane %v210, 0
    %vm212 = vcmask 261120
    %v214 = vsel %vm212, %v202, 0
    %v217 = vsel %vm212, %v203, 0
    %v220 = vsel %vm212, %v204, 0
    %v223 = vsel %vm212, %v205, 0
    %225 = vmatpush.msra.mxu0 0.0
    %226 = vmatpush.msra.mxu0 0.0
    %227 = vmatpush.msra.mxu0 0.0
    %228 = vmatpush.msra.mxu0 0.0
    %229 = vmatpush.msra.mxu0 0.0
    %230 = vmatpush.msra.mxu0 0.0
    %231 = vmatpush.msra.mxu0 0.0
    %232 = vmatpush.msra.mxu0 0.0
    %233 = vmatpush.msra.mxu0 0.0
    %234 = vmatpush.msra.mxu0 0.0
    %235 = vmatpush.msra.mxu0 0.0
    %236 = vmatpush.msra.mxu0 0.0
    %237 = vmatpush.msra.mxu0 %v209
    %238 = vmatpush.msra.mxu0 %v208
    %239 = vmatpush.msra.mxu0 %v207
    %240 = vmatpush.msra.mxu0 %v206
    %241 = vmatmul.f32.gmra.mxu0 %v214
    %v242 = vpop.f32.mrf.mxu0
    %v243 = vadd.f32 %v211, %v242
    %244 = vmatmul.f32.gmra.mxu0 %v217
    %v245 = vpop.f32.mrf.mxu0
    %v246 = vadd.f32 %v211, %v245
    %247 = vmatmul.f32.gmra.mxu0 %v220
    %v248 = vpop.f32.mrf.mxu0
    %v249 = vadd.f32 %v211, %v248
    %250 = vmatmul.f32.gmra.mxu0 %v223
    %v251 = vpop.f32.mrf.mxu0
    %v252 = vadd.f32 %v211, %v251
    %253 = vdwg.mxu0
    %254 = vst [vmem:[#allocation2] sm:$0xff] %v243
    %255 = vst [vmem:[#allocation2 + $0x8] sm:$0xff] %v246
    %256 = vst [vmem:[#allocation2 + $0x10] sm:$0xff] %v249
    %257 = vst [vmem:[#allocation2 + $0x18] sm:$0xff] %v252
    %v258 = vlaneseq
    %v259 = vand.u32 %v258, 127
    %vm260 = vcmp.ge.s32.totalorder %v259, 64
    %vm261 = vcmp.lt.s32.totalorder %v259, 96
    %vm262 = vmand %vm260, %vm261
    %v263 = vsel %vm262, 1.0, 0.5
    %v264 = vsel %vm262, 0.0, 0.5
    %v265 = vld [vmem:[#allocation3 + $0x8] sm:$0xff]
    %v266 = vld [vmem:[#allocation3 + $0x20] sm:$0xff]
    %v267 = vld [vmem:[#allocation3 + $0x38] sm:$0xff]
    %v268 = vld [vmem:[#allocation3 + $0x50] sm:$0xff]
    %v269 = vld [vmem:[#allocation2] ss:$16 sm:$0x3]
    %v271 = vsel %vm212, 0.0, 0
    %273 = vmatpush.msra.mxu0 0.0
    %274 = vmatpush.msra.mxu0 0.0
    %275 = vmatpush.msra.mxu0 0.0
    %276 = vmatpush.msra.mxu0 0.0
    %277 = vmatpush.msra.mxu0 0.0
    %278 = vmatpush.msra.mxu0 0.0
    %279 = vmatpush.msra.mxu0 0.0
    %280 = vmatpush.msra.mxu0 0.0
    %281 = vmatpush.msra.mxu0 0.0
    %282 = vmatpush.msra.mxu0 0.0
    %283 = vmatpush.msra.mxu0 0.0
    %284 = vmatpush.msra.mxu0 0.0
    %285 = vmatpush.msra.mxu0 %v268
    %286 = vmatpush.msra.mxu0 %v267
    %287 = vmatpush.msra.mxu0 %v266
    %288 = vmatpush.msra.mxu0 %v265
    %289 = vmatmul.f32.gmra.mxu0 %v271
    %v290 = vpop.f32.mrf.mxu0
    %v291 = vadd.f32 0.0, %v290
    %292 = vdwg.mxu0
    %v293 = vadd.f32 %v269, %v291
    %v294 = vtanh.pop %v293
    %v295 = vmul.f32 %v263, %v294
    %v296 = vadd.f32 %v295, %v264
    %v297 = vmul.f32 %v296, 0.0
    %299 = vrot.lane.b32.xlu0 %v296, 64
    %v300 = vpop.permute.xlu0 %299
    %v302 = vmul.f32 %v296, %v300
    %304 = vrot.lane.b32.xlu0 %v302, 32
    %v305 = vpop.permute.xlu0 %304
    %v307 = vadd.f32 %v297, %v305
    %v308 = vtanh.pop %v307
    %310 = vrot.lane.b32.xlu0 %v308, 64
    %v311 = vpop.permute.xlu0 %310
    %v313 = vmul.f32 %v296, %v311
    %s314 = scalar_lea.vmem [#allocation2], 2
    %v315 = vld [vmem:[%s314] ss:$16 sm:$0x3]
    %317 = vrot.lane.b32.xlu0 %v313, 32
    %v318 = vpop.permute.xlu0 %317
    %v319 = vsel %vm212, %v318, 0
    %321 = vmatpush.msra.mxu0 0.0
    %322 = vmatpush.msra.mxu0 0.0
    %323 = vmatpush.msra.mxu0 0.0
    %324 = vmatpush.msra.mxu0 0.0
    %325 = vmatpush.msra.mxu0 0.0
    %326 = vmatpush.msra.mxu0 0.0
    %327 = vmatpush.msra.mxu0 0.0
    %328 = vmatpush.msra.mxu0 0.0
    %329 = vmatpush.msra.mxu0 0.0
    %330 = vmatpush.msra.mxu0 0.0
    %331 = vmatpush.msra.mxu0 0.0
    %332 = vmatpush.msra.mxu0 0.0
    %333 = vmatpush.msra.mxu0 %v268
    %334 = vmatpush.msra.mxu0 %v267
    %335 = vmatpush.msra.mxu0 %v266
    %336 = vmatpush.msra.mxu0 %v265
    %337 = vmatmul.f32.gmra.mxu0 %v319
    %v338 = vpop.f32.mrf.mxu0
    %v339 = vadd.f32 0.0, %v338
    %340 = vdwg.mxu0
    %v341 = vadd.f32 %v315, %v339
    %v342 = vtanh.pop %v341
    %v343 = vmul.f32 %v263, %v342
    %v344 = vadd.f32 %v343, %v264
    %v345 = vmul.f32 %v344, %v307
    %347 = vrot.lane.b32.xlu0 %v344, 64
    %v348 = vpop.permute.xlu0 %347
    %v350 = vmul.f32 %v344, %v348
    %352 = vrot.lane.b32.xlu0 %v350, 32
    %v353 = vpop.permute.xlu0 %352
    %v355 = vadd.f32 %v345, %v353
    %v356 = vtanh.pop %v355
    %358 = vrot.lane.b32.xlu0 %v356, 64
    %v359 = vpop.permute.xlu0 %358
    %v361 = vmul.f32 %v344, %v359
    %s362 = scalar_lea.vmem [#allocation2], 4
    %v363 = vld [vmem:[%s362] ss:$16 sm:$0x3]
    %365 = vrot.lane.b32.xlu0 %v361, 32
    %v366 = vpop.permute.xlu0 %365
    %v367 = vsel %vm212, %v366, 0
    %369 = vmatpush.msra.mxu0 0.0
    %370 = vmatpush.msra.mxu0 0.0
    %371 = vmatpush.msra.mxu0 0.0
    %372 = vmatpush.msra.mxu0 0.0
    %373 = vmatpush.msra.mxu0 0.0
    %374 = vmatpush.msra.mxu0 0.0
    %375 = vmatpush.msra.mxu0 0.0
    %376 = vmatpush.msra.mxu0 0.0
    %377 = vmatpush.msra.mxu0 0.0
    %378 = vmatpush.msra.mxu0 0.0
    %379 = vmatpush.msra.mxu0 0.0
    %380 = vmatpush.msra.mxu0 0.0
    %381 = vmatpush.msra.mxu0 %v268
    %382 = vmatpush.msra.mxu0 %v267
    %383 = vmatpush.msra.mxu0 %v266
    %384 = vmatpush.msra.mxu0 %v265
    %385 = vmatmul.f32.gmra.mxu0 %v367
    %v386 = vpop.f32.mrf.mxu0
    %v387 = vadd.f32 0.0, %v386
    %388 = vdwg.mxu0
    %v389 = vadd.f32 %v363, %v387
    %v390 = vtanh.pop %v389
    %v391 = vmul.f32 %v263, %v390
    %v392 = vadd.f32 %v391, %v264
    %v393 = vmul.f32 %v392, %v355
    %395 = vrot.lane.b32.xlu0 %v392, 64
    %v396 = vpop.permute.xlu0 %395
    %v398 = vmul.f32 %v392, %v396
    %400 = vrot.lane.b32.xlu0 %v398, 32
    %v401 = vpop.permute.xlu0 %400
    %v403 = vadd.f32 %v393, %v401
    %v404 = vtanh.pop %v403
    %406 = vrot.lane.b32.xlu0 %v404, 64
    %v407 = vpop.permute.xlu0 %406
    %v409 = vmul.f32 %v392, %v407
    %s410 = scalar_lea.vmem [#allocation2], 6
    %v411 = vld [vmem:[%s410] ss:$16 sm:$0x3]
    %413 = vrot.lane.b32.xlu0 %v409, 32
    %v414 = vpop.permute.xlu0 %413
    %v415 = vsel %vm212, %v414, 0
    %417 = vmatpush.msra.mxu0 0.0
    %418 = vmatpush.msra.mxu0 0.0
    %419 = vmatpush.msra.mxu0 0.0
    %420 = vmatpush.msra.mxu0 0.0
    %421 = vmatpush.msra.mxu0 0.0
    %422 = vmatpush.msra.mxu0 0.0
    %423 = vmatpush.msra.mxu0 0.0
    %424 = vmatpush.msra.mxu0 0.0
    %425 = vmatpush.msra.mxu0 0.0
    %426 = vmatpush.msra.mxu0 0.0
    %427 = vmatpush.msra.mxu0 0.0
    %428 = vmatpush.msra.mxu0 0.0
    %429 = vmatpush.msra.mxu0 %v268
    %430 = vmatpush.msra.mxu0 %v267
    %431 = vmatpush.msra.mxu0 %v266
    %432 = vmatpush.msra.mxu0 %v265
    %433 = vmatmul.f32.gmra.mxu0 %v415
    %v434 = vpop.f32.mrf.mxu0
    %v435 = vadd.f32 0.0, %v434
    %436 = vdwg.mxu0
    %v437 = vadd.f32 %v411, %v435
    %v438 = vtanh.pop %v437
    %v439 = vmul.f32 %v263, %v438
    %v440 = vadd.f32 %v439, %v264
    %v441 = vmul.f32 %v440, %v403
    %443 = vrot.lane.b32.xlu0 %v440, 64
    %v444 = vpop.permute.xlu0 %443
    %v446 = vmul.f32 %v440, %v444
    %448 = vrot.lane.b32.xlu0 %v446, 32
    %v449 = vpop.permute.xlu0 %448
    %v451 = vadd.f32 %v441, %v449
    %v452 = vtanh.pop %v451
    %454 = vrot.lane.b32.xlu0 %v452, 64
    %v455 = vpop.permute.xlu0 %454
    %v457 = vmul.f32 %v440, %v455
    %s458 = scalar_lea.vmem [#allocation2], 8
    %v459 = vld [vmem:[%s458] ss:$16 sm:$0x3]
    %461 = vrot.lane.b32.xlu0 %v457, 32
    %v462 = vpop.permute.xlu0 %461
    %v463 = vsel %vm212, %v462, 0
    %465 = vmatpush.msra.mxu0 0.0
    %466 = vmatpush.msra.mxu0 0.0
    %467 = vmatpush.msra.mxu0 0.0
    %468 = vmatpush.msra.mxu0 0.0
    %469 = vmatpush.msra.mxu0 0.0
    %470 = vmatpush.msra.mxu0 0.0
    %471 = vmatpush.msra.mxu0 0.0
    %472 = vmatpush.msra.mxu0 0.0
    %473 = vmatpush.msra.mxu0 0.0
    %474 = vmatpush.msra.mxu0 0.0
    %475 = vmatpush.msra.mxu0 0.0
    %476 = vmatpush.msra.mxu0 0.0
    %477 = vmatpush.msra.mxu0 %v268
    %478 = vmatpush.msra.mxu0 %v267
    %479 = vmatpush.msra.mxu0 %v266
    %480 = vmatpush.msra.mxu0 %v265
    %481 = vmatmul.f32.gmra.mxu0 %v463
    %v482 = vpop.f32.mrf.mxu0
    %v483 = vadd.f32 0.0, %v482
    %484 = vdwg.mxu0
    %v485 = vadd.f32 %v459, %v483
    %v486 = vtanh.pop %v485
    %v487 = vmul.f32 %v263, %v486
    %v488 = vadd.f32 %v487, %v264
    %v489 = vmul.f32 %v488, %v451
    %491 = vrot.lane.b32.xlu0 %v488, 64
    %v492 = vpop.permute.xlu0 %491
    %v494 = vmul.f32 %v488, %v492
    %496 = vrot.lane.b32.xlu0 %v494, 32
    %v497 = vpop.permute.xlu0 %496
    %v499 = vadd.f32 %v489, %v497
    %v500 = vtanh.pop %v499
    %502 = vrot.lane.b32.xlu0 %v500, 64
    %v503 = vpop.permute.xlu0 %502
    %v505 = vmul.f32 %v488, %v503
    %s506 = scalar_lea.vmem [#allocation2], 10
    %v507 = vld [vmem:[%s506] ss:$16 sm:$0x3]
    %509 = vrot.lane.b32.xlu0 %v505, 32
    %v510 = vpop.permute.xlu0 %509
    %v511 = vsel %vm212, %v510, 0
    %513 = vmatpush.msra.mxu0 0.0
    %514 = vmatpush.msra.mxu0 0.0
    %515 = vmatpush.msra.mxu0 0.0
    %516 = vmatpush.msra.mxu0 0.0
    %517 = vmatpush.msra.mxu0 0.0
    %518 = vmatpush.msra.mxu0 0.0
    %519 = vmatpush.msra.mxu0 0.0
    %520 = vmatpush.msra.mxu0 0.0
    %521 = vmatpush.msra.mxu0 0.0
    %522 = vmatpush.msra.mxu0 0.0
    %523 = vmatpush.msra.mxu0 0.0
    %524 = vmatpush.msra.mxu0 0.0
    %525 = vmatpush.msra.mxu0 %v268
    %526 = vmatpush.msra.mxu0 %v267
    %527 = vmatpush.msra.mxu0 %v266
    %528 = vmatpush.msra.mxu0 %v265
    %529 = vmatmul.f32.gmra.mxu0 %v511
    %v530 = vpop.f32.mrf.mxu0
    %v531 = vadd.f32 0.0, %v530
    %532 = vdwg.mxu0
    %v533 = vadd.f32 %v507, %v531
    %v534 = vtanh.pop %v533
    %v535 = vmul.f32 %v263, %v534
    %v536 = vadd.f32 %v535, %v264
    %v537 = vmul.f32 %v536, %v499
    %539 = vrot.lane.b32.xlu0 %v536, 64
    %v540 = vpop.permute.xlu0 %539
    %v542 = vmul.f32 %v536, %v540
    %544 = vrot.lane.b32.xlu0 %v542, 32
    %v545 = vpop.permute.xlu0 %544
    %v547 = vadd.f32 %v537, %v545
    %v548 = vtanh.pop %v547
    %550 = vrot.lane.b32.xlu0 %v548, 64
    %v551 = vpop.permute.xlu0 %550
    %v553 = vmul.f32 %v536, %v551
    %s554 = scalar_lea.vmem [#allocation2], 12
    %v555 = vld [vmem:[%s554] ss:$16 sm:$0x3]
    %557 = vrot.lane.b32.xlu0 %v553, 32
    %v558 = vpop.permute.xlu0 %557
    %v559 = vsel %vm212, %v558, 0
    %561 = vmatpush.msra.mxu0 0.0
    %562 = vmatpush.msra.mxu0 0.0
    %563 = vmatpush.msra.mxu0 0.0
    %564 = vmatpush.msra.mxu0 0.0
    %565 = vmatpush.msra.mxu0 0.0
    %566 = vmatpush.msra.mxu0 0.0
    %567 = vmatpush.msra.mxu0 0.0
    %568 = vmatpush.msra.mxu0 0.0
    %569 = vmatpush.msra.mxu0 0.0
    %570 = vmatpush.msra.mxu0 0.0
    %571 = vmatpush.msra.mxu0 0.0
    %572 = vmatpush.msra.mxu0 0.0
    %573 = vmatpush.msra.mxu0 %v268
    %574 = vmatpush.msra.mxu0 %v267
    %575 = vmatpush.msra.mxu0 %v266
    %576 = vmatpush.msra.mxu0 %v265
    %577 = vmatmul.f32.gmra.mxu0 %v559
    %v578 = vpop.f32.mrf.mxu0
    %v579 = vadd.f32 0.0, %v578
    %580 = vdwg.mxu0
    %v581 = vadd.f32 %v555, %v579
    %v582 = vtanh.pop %v581
    %v583 = vmul.f32 %v263, %v582
    %v584 = vadd.f32 %v583, %v264
    %v585 = vmul.f32 %v584, %v547
    %587 = vrot.lane.b32.xlu0 %v584, 64
    %v588 = vpop.permute.xlu0 %587
    %v590 = vmul.f32 %v584, %v588
    %592 = vrot.lane.b32.xlu0 %v590, 32
    %v593 = vpop.permute.xlu0 %592
    %v595 = vadd.f32 %v585, %v593
    %v596 = vtanh.pop %v595
    %598 = vrot.lane.b32.xlu0 %v596, 64
    %v599 = vpop.permute.xlu0 %598
    %v601 = vmul.f32 %v584, %v599
    %s602 = scalar_lea.vmem [#allocation2], 14
    %v603 = vld [vmem:[%s602] ss:$16 sm:$0x3]
    %605 = vrot.lane.b32.xlu0 %v601, 32
    %v606 = vpop.permute.xlu0 %605
    %v607 = vsel %vm212, %v606, 0
    %609 = vmatpush.msra.mxu0 0.0
    %610 = vmatpush.msra.mxu0 0.0
    %611 = vmatpush.msra.mxu0 0.0
    %612 = vmatpush.msra.mxu0 0.0
    %613 = vmatpush.msra.mxu0 0.0
    %614 = vmatpush.msra.mxu0 0.0
    %615 = vmatpush.msra.mxu0 0.0
    %616 = vmatpush.msra.mxu0 0.0
    %617 = vmatpush.msra.mxu0 0.0
    %618 = vmatpush.msra.mxu0 0.0
    %619 = vmatpush.msra.mxu0 0.0
    %620 = vmatpush.msra.mxu0 0.0
    %621 = vmatpush.msra.mxu0 %v268
    %622 = vmatpush.msra.mxu0 %v267
    %623 = vmatpush.msra.mxu0 %v266
    %624 = vmatpush.msra.mxu0 %v265
    %625 = vmatmul.f32.gmra.mxu0 %v607
    %v626 = vpop.f32.mrf.mxu0
    %v627 = vadd.f32 0.0, %v626
    %628 = vdwg.mxu0
    %v629 = vadd.f32 %v603, %v627
    %v630 = vtanh.pop %v629
    %v631 = vmul.f32 %v263, %v630
    %v632 = vadd.f32 %v631, %v264
    %v633 = vmul.f32 %v632, %v595
    %635 = vrot.lane.b32.xlu0 %v632, 64
    %v636 = vpop.permute.xlu0 %635
    %v638 = vmul.f32 %v632, %v636
    %640 = vrot.lane.b32.xlu0 %v638, 32
    %v641 = vpop.permute.xlu0 %640
    %v643 = vadd.f32 %v633, %v641
    %v644 = vtanh.pop %v643
    %646 = vrot.lane.b32.xlu0 %v644, 64
    %v647 = vpop.permute.xlu0 %646
    %v649 = vmul.f32 %v632, %v647
    %v650 = vld [vmem:[#allocation3 + $0x10] sm:$0xff]
    %v651 = vld [vmem:[#allocation3 + $0x28] sm:$0xff]
    %v652 = vld [vmem:[#allocation3 + $0x40] sm:$0xff]
    %v653 = vld [vmem:[#allocation3 + $0x58] sm:$0xff]
    %v654 = vld [vmem:[%s2 + $0x5] sm:$0x1]
    %v655 = vperm.slane %v654, 0
    %657 = vrot.lane.b32.xlu0 %v649, 32
    %v658 = vpop.permute.xlu0 %657
    %v659 = vsel %vm212, %v658, 0
    %661 = vmatpush.msra.mxu0 0.0
    %662 = vmatpush.msra.mxu0 0.0
    %663 = vmatpush.msra.mxu0 0.0
    %664 = vmatpush.msra.mxu0 0.0
    %665 = vmatpush.msra.mxu0 0.0
    %666 = vmatpush.msra.mxu0 0.0
    %667 = vmatpush.msra.mxu0 0.0
    %668 = vmatpush.msra.mxu0 0.0
    %669 = vmatpush.msra.mxu0 0.0
    %670 = vmatpush.msra.mxu0 0.0
    %671 = vmatpush.msra.mxu0 0.0
    %672 = vmatpush.msra.mxu0 0.0
    %673 = vmatpush.msra.mxu0 %v653
    %674 = vmatpush.msra.mxu0 %v652
    %675 = vmatpush.msra.mxu0 %v651
    %676 = vmatpush.msra.mxu0 %v650
    %677 = vmatmul.f32.gmra.mxu0 %v659
    %v678 = vpop.f32.mrf.mxu0
    %v679 = vadd.f32 %v655, %v678
    %680 = vdwg.mxu0
    %vm681 = vcmask 779264
    %682 = vst.msk [vmem:[#allocation6] sm:$0x3] %vm681, %v679
    // Predicated region
    $region18: #{cnn_lstm_forward.1} parent=1 // pred_check
      _
    $region19: #{cnn_lstm_forward.1} parent=1 // pred_check_branch
      %684 = sbr.rel (0) target = $region21
    $region20: #{cnn_lstm_forward.1} parent=1 // pred_region
      %686 = vsyncadd [#allocation5], 0
      %s688 = sshll.u32 [#allocation6], 4
      %s689 = int_to_ptr.vmem [resolvable:$true] %s688
      %s690 = sshll.u32 %s3, 4
      %s691 = int_to_ptr.hbm [resolvable:$true] %s690
      %693 = dma.vmem_to_hbm [thread:$0]  %s689, 32, %s691, [#allocation5]
    $region21: #{cnn_lstm_forward.1} parent=1 // pred_fallthru
      _
    // Predicated region
    $region22: #{cnn_lstm_forward.1} parent=1 // pred_check
      _
    $region23: #{cnn_lstm_forward.1} parent=1 // pred_check_branch
      %695 = sbr.rel (0) target = $region25
    $region24: #{cnn_lstm_forward.1} parent=1 // pred_region
      %697 = dma.done [#allocation5], 32
    $region25: #{cnn_lstm_forward.1} parent=1 // pred_fallthru
      _
    %698 = vsyncpa [#allocation4], 1
    %699 = vsyncpa [#allocation5], 1

</llo_original>
